<compile_context>
chip_gen: v7x
topology: tpu7x:2x2x1
jax: 0.10.0
libtpu: 0.0.40
codegen_flags: <defaults>
</compile_context>

<pallas_src>
import math

import jax
import jax.numpy as jnp
from jax import lax
from jax.experimental import pallas as pl
from jax.experimental.pallas import tpu as pltpu


def _round_up(x, m):
    return (x + m - 1) // m * m


# ----------------------------- Pallas kernel -------------------------------

def _conv_gemm_kernel(p_ref, w_ref, b_ref, o_ref, acc_ref):
    """One (tm, Np) output tile; K is the innermost ("arbitrary") grid axis."""
    k = pl.program_id(1)

    @pl.when(k == 0)
    def _():
        acc_ref[...] = jnp.zeros_like(acc_ref)

    acc_ref[...] += jnp.dot(p_ref[...], w_ref[...],
                            preferred_element_type=jnp.float32)

    @pl.when(k == pl.num_programs(1) - 1)
    def _():
        # f32 epilogue (bias add + cast); cheap and v5e-safe (no bf16 VPU).
        o_ref[...] = (acc_ref[...] + b_ref[...]).astype(o_ref.dtype)


def _pick_tm(m):
    # Big tiles amortize the ~0.35 us per-grid-step overhead; keep >=8 steps
    # for small problems so megacore / pipeline fill still has work.
    if m >= 8 * 512:
        return 512
    if m >= 8 * 128:
        return 128
    return m  # tiny problem: single full-extent block


def _pick_tk(kp):
    # kp is a multiple of 128; pick a divisor that is a multiple of 128.
    if kp <= 1024:
        return kp
    return 128 * math.gcd(kp // 128, 8)


def _gemm_bias(patches, w_mat, bias):
    """patches: [M, Kp] bf16, w_mat: [Kp, Np] bf16, bias: [1, Np] f32 -> [M, Np] f32."""
    M, Kp = patches.shape
    Np = w_mat.shape[1]

    tm = _pick_tm(M)
    tk = _pick_tk(Kp)
    grid = (pl.cdiv(M, tm), Kp // tk)

    cost = pl.CostEstimate(
        flops=2 * M * Kp * Np,
        transcendentals=0,
        bytes_accessed=int(M * Kp * 2 + Kp * Np * 2 + M * Np * 4 + Np * 4),
    )

    return pl.pallas_call(
        _conv_gemm_kernel,
        out_shape=jax.ShapeDtypeStruct((M, Np), jnp.float32),
        grid_spec=pltpu.PrefetchScalarGridSpec(
            num_scalar_prefetch=0,
            grid=grid,
            in_specs=[
                pl.BlockSpec((tm, tk), lambda i, k: (i, k)),
                pl.BlockSpec((tk, Np), lambda i, k: (k, 0)),
                pl.BlockSpec((1, Np), lambda i, k: (0, 0)),
            ],
            out_specs=pl.BlockSpec((tm, Np), lambda i, k: (i, 0)),
            scratch_shapes=[pltpu.VMEM((tm, Np), jnp.float32)],
        ),
        compiler_params=pltpu.CompilerParams(
            dimension_semantics=("parallel", "arbitrary"),
            vmem_limit_bytes=48 * 1024 * 1024,
        ),
        cost_estimate=cost,
    )(patches, w_mat, bias)


# --------------------------- Downsample forward -----------------------------

@jax.jit
def downsample_forward(x, weight, bias):
    """
    x:      [B, C, D, H, W]  (NCDHW, like PyTorch)
    weight: [C, C, 3, 3, 3]  (OIDHW, like PyTorch nn.Conv3d)
    bias:   [C]
    returns [B, C, D//2, H//2, W//2]  (stride-2, pad-1, kernel-3 conv)
    """
    B, C, D, H, W = x.shape
    OD = (D + 2 - 3) // 2 + 1
    OH = (H + 2 - 3) // 2 + 1
    OW = (W + 2 - 3) // 2 + 1

    # --- im2col glue (plain JAX), channels-last + bf16 to halve HBM traffic ---
    x_cl = jnp.transpose(x, (0, 2, 3, 4, 1)).astype(jnp.bfloat16)   # NDHWC
    xp = jnp.pad(x_cl, ((0, 0), (1, 1), (1, 1), (1, 1), (0, 0)))

    taps = []
    for kd in range(3):
        for kh in range(3):
            for kw in range(3):
                taps.append(xp[:,
                               kd:kd + 2 * OD:2,
                               kh:kh + 2 * OH:2,
                               kw:kw + 2 * OW:2, :])      # [B, OD, OH, OW, C]
    # K index = (kd*9 + kh*3 + kw) * C + c_in
    patches = jnp.concatenate(taps, axis=-1)              # [B, OD, OH, OW, 27*C]

    M = B * OD * OH * OW
    K = 27 * C
    patches = patches.reshape(M, K)

    Kp = _round_up(K, 128)   # MXU-aligned contraction
    Np = _round_up(C, 128)   # lane-dense output stores
    if Kp > K:
        patches = jnp.pad(patches, ((0, 0), (0, Kp - K)))

    # weight [C_out, C_in, 3, 3, 3] -> [K, C_out] matching the K ordering above.
    w_mat = jnp.transpose(weight, (2, 3, 4, 1, 0)).reshape(K, C)
    w_mat = jnp.pad(w_mat, ((0, Kp - K), (0, Np - C))).astype(jnp.bfloat16)
    b_row = jnp.pad(bias.astype(jnp.float32).reshape(1, C), ((0, 0), (0, Np - C)))

    # --- hot path: Pallas K-tiled GEMM + bias ---
    out_flat = _gemm_bias(patches, w_mat, b_row)          # [M, Np] f32

    out = out_flat[:, :C].reshape(B, OD, OH, OW, C)
    # Boundary layout conversion back to NCDHW to match the PyTorch module
    # (keep activations channels-last across a full UNet to avoid this per layer).
    return jnp.transpose(out, (0, 4, 1, 2, 3))


# ---------------------------------- main ------------------------------------

if __name__ == "__main__":
    key = jax.random.PRNGKey(0)
    k_x, k_w, k_b = jax.random.split(key, 3)

    B, C, D, H, W = 2, 4, 16, 16, 16
    x = jax.random.normal(k_x, (B, C, D, H, W), dtype=jnp.float32)

    # Deterministic parameter init (Conv3d-like uniform fan-in scaling).
    fan_in = C * 3 * 3 * 3
    bound = 1.0 / math.sqrt(fan_in)
    weight = jax.random.uniform(k_w, (C, C, 3, 3, 3), jnp.float32, -bound, bound)
    bias = jax.random.uniform(k_b, (C,), jnp.float32, -bound, bound)

    out = jax.block_until_ready(downsample_forward(x, weight, bias))

    # Reference with the same bf16-quantized operands (the kernel multiplies
    # bf16 on the MXU and accumulates in f32), so differences are
    # accumulation-order-level only.
    x_q = x.astype(jnp.bfloat16).astype(jnp.float32)
    w_q = weight.astype(jnp.bfloat16).astype(jnp.float32)
    ref = lax.conv_general_dilated(
        x_q, w_q, window_strides=(2, 2, 2),
        padding=((1, 1), (1, 1), (1, 1)),
        dimension_numbers=("NCDHW", "OIDHW", "NCDHW"),
    ) + bias[None, :, None, None, None]

    assert out.shape == (B, C, D // 2, H // 2, W // 2), out.shape
    max_err = float(jnp.max(jnp.abs(out - ref)))
    assert jnp.allclose(out, ref, atol=1e-2, rtol=1e-2), max_err

    print("KERNEL_OK")
</pallas_src>

<mosaic_0001>
module attributes {stable_mosaic.version = 11 : i64} {
  func.func @_conv_gemm_kernel(%arg0: i32, %arg1: i32, %arg2: memref<128x128xbf16, #tpu.memory_space<vmem>>, %arg3: memref<128x128xbf16, #tpu.memory_space<vmem>>, %arg4: memref<1x128xf32, #tpu.memory_space<vmem>>, %arg5: memref<128x128xf32, #tpu.memory_space<vmem>>, %arg6: memref<128x128xf32, #tpu.memory_space<vmem>>) attributes {dimension_semantics = [#tpu.dimension_semantics<parallel>, #tpu.dimension_semantics<arbitrary>], iteration_bounds = array<i64: 8, 1>, scalar_prefetch = 0 : i64, scratch_operands = 1 : i64, tpu.core_type = #tpu.core_type<tc>, window_params = [{transform_indices = @transform_0, window_bounds = array<i64: 128, 128>}, {transform_indices = @transform_1, window_bounds = array<i64: 128, 128>}, {pipeline_mode = #tpu.pipeline_mode<synchronous>, transform_indices = @transform_2, window_bounds = array<i64: 1, 128>}, {transform_indices = @transform_3, window_bounds = array<i64: 128, 128>}]} {
    %c0_i32 = arith.constant 0 : i32
    %0 = arith.cmpi eq, %arg1, %c0_i32 : i32
    %1 = arith.extui %0 : i1 to i32
    %c0_i32_0 = arith.constant 0 : i32
    %2 = arith.cmpi ne, %1, %c0_i32_0 : i32
    scf.if %2 {
      %cst_10 = arith.constant 0.000000e+00 : f32
      %12 = vector.broadcast %cst_10 : f32 to vector<128x128xf32>
      %c0_11 = arith.constant 0 : index
      %c0_12 = arith.constant 0 : index
      %13 = vector.load %arg6[%c0_11, %c0_12] : memref<128x128xf32, #tpu.memory_space<vmem>>, vector<128x128xf32>
      tpu.vector_store %arg6[%c0_11, %c0_12], %12 {strides = array<i32>} : memref<128x128xf32, #tpu.memory_space<vmem>>, vector<128x128xf32>,
    } else {
    }
    %c0 = arith.constant 0 : index
    %c0_1 = arith.constant 0 : index
    %3 = vector.load %arg6[%c0, %c0_1] : memref<128x128xf32, #tpu.memory_space<vmem>>, vector<128x128xf32>
    %c0_2 = arith.constant 0 : index
    %c0_3 = arith.constant 0 : index
    %4 = vector.load %arg2[%c0_2, %c0_3] : memref<128x128xbf16, #tpu.memory_space<vmem>>, vector<128x128xbf16>
    %c0_4 = arith.constant 0 : index
    %c0_5 = arith.constant 0 : index
    %5 = vector.load %arg3[%c0_4, %c0_5] : memref<128x128xbf16, #tpu.memory_space<vmem>>, vector<128x128xbf16>
    %cst = arith.constant dense<0.000000e+00> : vector<128x128xf32>
    %6 = tpu.matmul %4, %5, %cst {dimension_numbers = #tpu.dot_dimension_numbers<[1], [0], [0], [1], [0, 0, 1, 1], [], []>} : vector<128x128xbf16>, vector<128x128xbf16>, vector<128x128xf32> -> vector<128x128xf32>
    %7 = arith.addf %3, %6 : vector<128x128xf32>
    %c0_6 = arith.constant 0 : index
    %c0_7 = arith.constant 0 : index
    %8 = vector.load %arg6[%c0_6, %c0_7] : memref<128x128xf32, #tpu.memory_space<vmem>>, vector<128x128xf32>
    tpu.vector_store %arg6[%c0_6, %c0_7], %7 {strides = array<i32>} : memref<128x128xf32, #tpu.memory_space<vmem>>, vector<128x128xf32>,
    %c0_i32_8 = arith.constant 0 : i32
    %9 = arith.cmpi eq, %arg1, %c0_i32_8 : i32
    %10 = arith.extui %9 : i1 to i32
    %c0_i32_9 = arith.constant 0 : i32
    %11 = arith.cmpi ne, %10, %c0_i32_9 : i32
    scf.if %11 {
      %c0_10 = arith.constant 0 : index
      %c0_11 = arith.constant 0 : index
      %12 = vector.load %arg6[%c0_10, %c0_11] : memref<128x128xf32, #tpu.memory_space<vmem>>, vector<128x128xf32>
      %c0_12 = arith.constant 0 : index
      %c0_13 = arith.constant 0 : index
      %13 = vector.load %arg4[%c0_12, %c0_13] : memref<1x128xf32, #tpu.memory_space<vmem>>, vector<1x128xf32>
      %14 = vector.broadcast %13 : vector<1x128xf32> to vector<128x128xf32>
      %15 = arith.addf %12, %14 : vector<128x128xf32>
      %c0_14 = arith.constant 0 : index
      %c0_15 = arith.constant 0 : index
      %16 = vector.load %arg5[%c0_14, %c0_15] : memref<128x128xf32, #tpu.memory_space<vmem>>, vector<128x128xf32>
      tpu.vector_store %arg5[%c0_14, %c0_15], %15 {strides = array<i32>} : memref<128x128xf32, #tpu.memory_space<vmem>>, vector<128x128xf32>,
    } else {
    }
    return
  }
  func.func @transform_0(%arg0: i32, %arg1: i32) -> (i32, i32) {
    %c0_i32 = arith.constant 0 : i32
    return %arg0, %arg1 : i32, i32
  }
  func.func @transform_1(%arg0: i32, %arg1: i32) -> (i32, i32) {
    %c0_i32 = arith.constant 0 : i32
    %c0_i32_0 = arith.constant 0 : i32
    return %arg1, %c0_i32 : i32, i32
  }
  func.func @transform_2(%arg0: i32, %arg1: i32) -> (i32, i32) {
    %c0_i32 = arith.constant 0 : i32
    %c0_i32_0 = arith.constant 0 : i32
    %c0_i32_1 = arith.constant 0 : i32
    return %c0_i32, %c0_i32_0 : i32, i32
  }
  func.func @transform_3(%arg0: i32, %arg1: i32) -> (i32, i32) {
    %c0_i32 = arith.constant 0 : i32
    %c0_i32_0 = arith.constant 0 : i32
    return %arg0, %c0_i32 : i32, i32
  }
}

</mosaic_0001>

<llo_original>
// kernel: downsample_forward.1
$region0: #{downsample_forward.1}
  #allocation0 [shape = 'u32[]', space=smem, size = 0x4, offset = 0x4, fixed_abs, tag = 'smem constant byte address 0x4 - core index']
  #allocation1 [shape = 'u32[144,128]{1,0:T(1,128)}', space=vmem, size = 0x12000, scoped, tag = 'internal scratch']
  #allocation2 [shape = 'f32[128,128]{1,0:T(8,128)}', space=vmem, size = 0x10000, scoped, tag = 'scratch operand']
  %s0 = inlined_call_operand.vmem [shape: bf16[1024,128], index: 0, kind: input, shape index: {}]
  %s1 = inlined_call_operand.vmem [shape: bf16[128,128], index: 1, kind: input, shape index: {}]
  %s2 = inlined_call_operand.vmem [shape: f32[1,128], index: 2, kind: input, shape index: {}]
  %s3 = inlined_call_operand.vmem [shape: f32[1024,128], index: 3, kind: output, shape index: {}]
  %s4 = sld [smem:[#allocation0]]
  $region53: #{downsample_forward.1} parent=0
    _
  %s6 = ssub.s32 1, %s4
  %s7 = scalar_select 0, %s6, %s4
  loop: start=0, step=1, limit=10
  $region2: #{downsample_forward.1} parent=0 // loop_pre_header
    _
  $region3: #{downsample_forward.1} parent=0 // loop_header
    %s9 = sphi 0, %s13
    %p10 = scmp.ge.s32.totalorder %s9, 10
    %s16 = sphi 0, %s28
    %s17 = sphi 0, %s24
    %s18 = sphi 0, %s16
    %s19 = sphi 0, %s17
    %s20 = sphi 0, %s18
    %s21 = sphi 0, %s19
    %s33 = sphi 0, %s35
    %s36 = sphi 0, %s33
    %s37 = sphi 0, %s36
    %s53 = sphi 0, %s37
    %s59 = sphi 0, %s61
    %s62 = sphi 0, %s59
    %s63 = sphi 0, %s62
    %s79 = sphi 0, %s63
    %s83 = sphi 0, %s83
    %s85 = sphi 0, %s83
    %s86 = sphi 0, %s85
    %s100 = sphi 0, %s86
    %s106 = sphi 0, %s108
    %s109 = sphi 0, %s106
    %s110 = sphi 0, %s109
    %s126 = sphi 0, %s110
  $region4: #{downsample_forward.1} parent=0 // loop_header_branch
    %12 = sbr.rel (%p10) target = $region8
  $region5: #{downsample_forward.1} parent=0 // loop_body
    %s14 = ssub.s32 %s9, 1
    %s15 = ssub.s32 %s9, 2
    %s22 = sadd.s32 1, %s17
    %p23 = scmp.ge.s32.totalorder %s22, 1
    %s24 = scalar_select %p23, 0, %s22
    %s25 = sadd.s32 1, %s16
    %s26 = scalar_select %p23, %s25, %s16
    %p27 = scmp.ge.s32.totalorder %s26, 8
    %s28 = scalar_select %p27, 0, %s26
    %s29 = ssub.s32 %s16, %s28
    %s30 = ssub.s32 %s17, %s24
    %s31 = sor.u32 %s29, %s30
    %p32 = scmp.eq.s32.totalorder %s31, 0
    %s34 = sadd.s32 %s33, 1
    %s35 = scalar_select %p32, %s33, %s34
    %p38 = pneg %p32
    %p39 = scmp.eq.s32.totalorder %s9, 7
    %p40 = por %p38, %p39
    %p41 = scmp.ne.s32.totalorder %s33, %s36
    %p42 = scmp.eq.s32.totalorder %s9, 0
    %p43 = por %p41, %p42
    %p44 = scmp.ne.s32.totalorder %s33, %s36
    %p45 = scmp.eq.s32.totalorder %s14, 7
    %p46 = por %p44, %p45
    %p47 = scmp.ne.s32.totalorder %s36, %s37
    %p48 = scmp.eq.s32.totalorder %s14, 0
    %p49 = por %p47, %p48
    %p50 = scmp.ne.s32.totalorder %s36, %s37
    %p51 = scmp.eq.s32.totalorder %s15, 7
    %p52 = por %p50, %p51
    %p54 = scmp.ne.s32.totalorder %s37, %s53
    %p55 = scmp.eq.s32.totalorder %s15, 0
    %p56 = por %p54, %p55
    %s57 = ssub.s32 %s17, %s24
    %p58 = scmp.eq.s32.totalorder %s57, 0
    %s60 = sadd.s32 %s59, 1
    %s61 = scalar_select %p58, %s59, %s60
    %p64 = pneg %p58
    %p65 = scmp.eq.s32.totalorder %s9, 7
    %p66 = por %p64, %p65
    %p67 = scmp.ne.s32.totalorder %s59, %s62
    %p68 = scmp.eq.s32.totalorder %s9, 0
    %p69 = por %p67, %p68
    %p70 = scmp.ne.s32.totalorder %s59, %s62
    %p71 = scmp.eq.s32.totalorder %s14, 7
    %p72 = por %p70, %p71
    %p73 = scmp.ne.s32.totalorder %s62, %s63
    %p74 = scmp.eq.s32.totalorder %s14, 0
    %p75 = por %p73, %p74
    %p76 = scmp.ne.s32.totalorder %s62, %s63
    %p77 = scmp.eq.s32.totalorder %s15, 7
    %p78 = por %p76, %p77
    %p80 = scmp.ne.s32.totalorder %s63, %s79
    %p81 = scmp.eq.s32.totalorder %s15, 0
    %p82 = por %p80, %p81
    %s84 = sadd.s32 %s83, 1
    %p87 = scmp.eq.s32.totalorder %s9, 7
    %p88 = scmp.ne.s32.totalorder %s83, %s85
    %p89 = scmp.eq.s32.totalorder %s9, 0
    %p90 = por %p88, %p89
    %p91 = scmp.ne.s32.totalorder %s83, %s85
    %p92 = scmp.eq.s32.totalorder %s14, 7
    %p93 = por %p91, %p92
    %p94 = scmp.ne.s32.totalorder %s85, %s86
    %p95 = scmp.eq.s32.totalorder %s14, 0
    %p96 = por %p94, %p95
    %p97 = scmp.ne.s32.totalorder %s85, %s86
    %p98 = scmp.eq.s32.totalorder %s15, 7
    %p99 = por %p97, %p98
    %p101 = scmp.ne.s32.totalorder %s86, %s100
    %p102 = scmp.eq.s32.totalorder %s15, 0
    %p103 = por %p101, %p102
    %s104 = ssub.s32 %s16, %s28
    %p105 = scmp.eq.s32.totalorder %s104, 0
    %s107 = sadd.s32 %s106, 1
    %s108 = scalar_select %p105, %s106, %s107
    %p111 = pneg %p105
    %p112 = scmp.eq.s32.totalorder %s9, 7
    %p113 = por %p111, %p112
    %p114 = scmp.ne.s32.totalorder %s106, %s109
    %p115 = scmp.eq.s32.totalorder %s9, 0
    %p116 = por %p114, %p115
    %p117 = scmp.ne.s32.totalorder %s106, %s109
    %p118 = scmp.eq.s32.totalorder %s14, 7
    %p119 = por %p117, %p118
    %p120 = scmp.ne.s32.totalorder %s109, %s110
    %p121 = scmp.eq.s32.totalorder %s14, 0
    %p122 = por %p120, %p121
    %p123 = scmp.ne.s32.totalorder %s109, %s110
    %p124 = scmp.eq.s32.totalorder %s15, 7
    %p125 = por %p123, %p124
    %p127 = scmp.ne.s32.totalorder %s110, %s126
    %p128 = scmp.eq.s32.totalorder %s15, 0
    %p129 = por %p127, %p128
    %p130 = scmp.le.s32.totalorder 1, %s9
    %p131 = scmp.lt.s32.totalorder %s9, 9
    %p132 = pnand %p130, %p131
    %p133 = pneg %p132
    // Predicated region
    $region9: #{downsample_forward.1} parent=5 // pred_check
      _
    $region10: #{downsample_forward.1} parent=5 // pred_check_branch
      %135 = sbr.rel (%p132) target = $region12
    $region11: #{downsample_forward.1} parent=5 // pred_region
      %s136 = ssub.s32 %s9, 1
      // Predicated region
      $region13: #{downsample_forward.1} parent=11 // pred_check
        %p137 = pneg %p75
      $region14: #{downsample_forward.1} parent=11 // pred_check_branch
        %139 = sbr.rel (%p137) target = $region16
      $region15: #{downsample_forward.1} parent=11 // pred_region
        %s140 = smul.u32 16, %s19
        %p141 = scmp.lt.s32.totalorder %s140, 15
        %s142 = scalar_select %p141, %s140, 15
        %s143 = smul.addr %s142, 4
        %s144 = scalar_lea.vmem %s1, %s143
        %s145 = smul.u32 16, %s19
      $region16: #{downsample_forward.1} parent=11 // pred_fallthru
        _
      // Predicated region
      $region17: #{downsample_forward.1} parent=11 // pred_check
        %p146 = pneg %p96
      $region18: #{downsample_forward.1} parent=11 // pred_check_branch
        %148 = sbr.rel (%p146) target = $region20
      $region19: #{downsample_forward.1} parent=11 // pred_region
        _
      $region20: #{downsample_forward.1} parent=11 // pred_fallthru
        _
    $region12: #{downsample_forward.1} parent=5 // pred_fallthru
      _
    %p149 = scmp.lt.s32.totalorder %s9, 8
    // Predicated region
    $region21: #{downsample_forward.1} parent=5 // pred_check
      %p150 = pneg %p149
    $region22: #{downsample_forward.1} parent=5 // pred_check_branch
      %152 = sbr.rel (%p150) target = $region24
    $region23: #{downsample_forward.1} parent=5 // pred_region
      // Predicated region
      $region25: #{downsample_forward.1} parent=23 // pred_check
        %p153 = pneg %p43
      $region26: #{downsample_forward.1} parent=23 // pred_check_branch
        %155 = sbr.rel (%p153) target = $region28
      $region27: #{downsample_forward.1} parent=23 // pred_region
        %s156 = smul.u32 16, %s16
        %p157 = scmp.lt.s32.totalorder %s156, 127
        %s158 = scalar_select %p157, %s156, 127
        %p159 = scmp.lt.s32.totalorder %s17, 0
        %s160 = scalar_select %p159, %s17, 0
        %s161 = sadd.s32 %s160, %s158
        %s162 = smul.addr %s161, 4
        %s163 = scalar_lea.vmem %s0, %s162
        %s164 = smul.u32 16, %s16
      $region28: #{downsample_forward.1} parent=23 // pred_fallthru
        _
    $region24: #{downsample_forward.1} parent=5 // pred_fallthru
      _
    %p165 = scmp.le.s32.totalorder 1, %s9
    %p166 = scmp.lt.s32.totalorder %s9, 9
    %p167 = pnand %p165, %p166
    %p168 = pneg %p167
    // Predicated region
    $region29: #{downsample_forward.1} parent=5 // pred_check
      _
    $region30: #{downsample_forward.1} parent=5 // pred_check_branch
      %170 = sbr.rel (%p167) target = $region32
    $region31: #{downsample_forward.1} parent=5 // pred_region
      %s171 = ssub.s32 %s9, 1
      %s172 = smul.u32 16, %s18
      %p173 = scmp.lt.s32.totalorder %s172, 127
      %s174 = scalar_select %p173, %s172, 127
      %p175 = scmp.lt.s32.totalorder %s19, 0
      %s176 = scalar_select %p175, %s19, 0
      %s177 = sadd.s32 %s176, %s174
      %s178 = smul.addr %s177, 4
      %s179 = scalar_lea.vmem %s0, %s178
      %p180 = pneg %p49
      %p181 = pneg %p46
      %s182 = smul.u32 16, %s19
      %p183 = scmp.lt.s32.totalorder %s182, 15
      %s184 = scalar_select %p183, %s182, 15
      %s185 = smul.addr %s184, 4
      %s186 = scalar_lea.vmem %s1, %s185
      %p187 = pneg %p75
      %p188 = pneg %p72
      %p189 = pneg %p96
      %p190 = pneg %p93
      %p191 = pneg %p122
      %p192 = pneg %p119
      %s193 = smul.u32 16, %s18
      %p194 = scmp.lt.s32.totalorder %s193, 127
      %s195 = scalar_select %p194, %s193, 127
      %s196 = smul.addr %s195, 8
      %s197 = scalar_lea.vmem %s3, %s196
      %s198 = smul.u32 16, %s18
      %p199 = scmp.lt.s32.totalorder %s198, 127
      %s200 = scalar_select %p199, %s198, 127
      %p201 = scmp.lt.s32.totalorder %s19, 0
      %s202 = scalar_select %p201, %s19, 0
      %s203 = sadd.s32 %s202, %s200
      %s204 = smul.addr %s203, 4
      %s205 = scalar_lea.vmem %s0, %s204
      %s206 = smul.u32 16, %s18
      %s207 = smul.u32 16, %s19
      %p208 = scmp.lt.s32.totalorder %s207, 15
      %s209 = scalar_select %p208, %s207, 15
      %s210 = smul.addr %s209, 4
      %s211 = scalar_lea.vmem %s1, %s210
      %s212 = smul.u32 16, %s19
      %s213 = smul.u32 16, %s18
      %p214 = scmp.lt.s32.totalorder %s213, 127
      %s215 = scalar_select %p214, %s213, 127
      %s216 = smul.addr %s215, 8
      %s217 = scalar_lea.vmem %s3, %s216
      %s218 = smul.u32 16, %s18
      %p220 = scmp.eq.s32.totalorder %s19, 0
      // Predicated region
      $region33: #{downsample_forward.1} parent=31 // pred_check
        %p221 = pneg %p220
      $region34: #{downsample_forward.1} parent=31 // pred_check_branch
        %223 = sbr.rel (%p221) target = $region36
      $region35: #{downsample_forward.1} parent=31 // pred_region
        %224 = vst [vmem:[#allocation2] sm:$0xff] 0.0
        %225 = vst [vmem:[#allocation2 + $0x8] sm:$0xff] 0.0
        %226 = vst [vmem:[#allocation2 + $0x10] sm:$0xff] 0.0
        %227 = vst [vmem:[#allocation2 + $0x18] sm:$0xff] 0.0
        %228 = vst [vmem:[#allocation2 + $0x20] sm:$0xff] 0.0
        %229 = vst [vmem:[#allocation2 + $0x28] sm:$0xff] 0.0
        %230 = vst [vmem:[#allocation2 + $0x30] sm:$0xff] 0.0
        %231 = vst [vmem:[#allocation2 + $0x38] sm:$0xff] 0.0
        %232 = vst [vmem:[#allocation2 + $0x40] sm:$0xff] 0.0
        %233 = vst [vmem:[#allocation2 + $0x48] sm:$0xff] 0.0
        %234 = vst [vmem:[#allocation2 + $0x50] sm:$0xff] 0.0
        %235 = vst [vmem:[#allocation2 + $0x58] sm:$0xff] 0.0
        %236 = vst [vmem:[#allocation2 + $0x60] sm:$0xff] 0.0
        %237 = vst [vmem:[#allocation2 + $0x68] sm:$0xff] 0.0
        %238 = vst [vmem:[#allocation2 + $0x70] sm:$0xff] 0.0
        %239 = vst [vmem:[#allocation2 + $0x78] sm:$0xff] 0.0
      $region36: #{downsample_forward.1} parent=31 // pred_fallthru
        _
      %v240 = vld [vmem:[#allocation2] sm:$0xff]
      %v241 = vld [vmem:[#allocation2 + $0x8] sm:$0xff]
      %v242 = vld [vmem:[#allocation2 + $0x10] sm:$0xff]
      %v243 = vld [vmem:[#allocation2 + $0x18] sm:$0xff]
      %v244 = vld [vmem:[#allocation2 + $0x20] sm:$0xff]
      %v245 = vld [vmem:[#allocation2 + $0x28] sm:$0xff]
      %v246 = vld [vmem:[#allocation2 + $0x30] sm:$0xff]
      %v247 = vld [vmem:[#allocation2 + $0x38] sm:$0xff]
      %v248 = vld [vmem:[#allocation2 + $0x40] sm:$0xff]
      %v249 = vld [vmem:[#allocation2 + $0x48] sm:$0xff]
      %v250 = vld [vmem:[#allocation2 + $0x50] sm:$0xff]
      %v251 = vld [vmem:[#allocation2 + $0x58] sm:$0xff]
      %v252 = vld [vmem:[#allocation2 + $0x60] sm:$0xff]
      %v253 = vld [vmem:[#allocation2 + $0x68] sm:$0xff]
      %v254 = vld [vmem:[#allocation2 + $0x70] sm:$0xff]
      %v255 = vld [vmem:[#allocation2 + $0x78] sm:$0xff]
      %v256 = vld [vmem:[%s205] sm:$0xf]
      %v257 = vld [vmem:[%s205 + $0x4] sm:$0xf]
      %v258 = vld [vmem:[%s205 + $0x8] sm:$0xf]
      %v259 = vld [vmem:[%s205 + $0xc] sm:$0xf]
      %v260 = vld [vmem:[%s205 + $0x10] sm:$0xf]
      %v261 = vld [vmem:[%s205 + $0x14] sm:$0xf]
      %v262 = vld [vmem:[%s205 + $0x18] sm:$0xf]
      %v263 = vld [vmem:[%s205 + $0x1c] sm:$0xf]
      %v264 = vld [vmem:[%s205 + $0x20] sm:$0xf]
      %v265 = vld [vmem:[%s205 + $0x24] sm:$0xf]
      %v266 = vld [vmem:[%s205 + $0x28] sm:$0xf]
      %v267 = vld [vmem:[%s205 + $0x2c] sm:$0xf]
      %v268 = vld [vmem:[%s205 + $0x30] sm:$0xf]
      %v269 = vld [vmem:[%s205 + $0x34] sm:$0xf]
      %v270 = vld [vmem:[%s205 + $0x38] sm:$0xf]
      %v271 = vld [vmem:[%s205 + $0x3c] sm:$0xf]
      %v272 = vld [vmem:[%s211] sm:$0xf]
      %v273 = vld [vmem:[%s211 + $0x4] sm:$0xf]
      %v274 = vld [vmem:[%s211 + $0x8] sm:$0xf]
      %v275 = vld [vmem:[%s211 + $0xc] sm:$0xf]
      %v276 = vld [vmem:[%s211 + $0x10] sm:$0xf]
      %v277 = vld [vmem:[%s211 + $0x14] sm:$0xf]
      %v278 = vld [vmem:[%s211 + $0x18] sm:$0xf]
      %v279 = vld [vmem:[%s211 + $0x1c] sm:$0xf]
      %v280 = vld [vmem:[%s211 + $0x20] sm:$0xf]
      %v281 = vld [vmem:[%s211 + $0x24] sm:$0xf]
      %v282 = vld [vmem:[%s211 + $0x28] sm:$0xf]
      %v283 = vld [vmem:[%s211 + $0x2c] sm:$0xf]
      %v284 = vld [vmem:[%s211 + $0x30] sm:$0xf]
      %v285 = vld [vmem:[%s211 + $0x34] sm:$0xf]
      %v286 = vld [vmem:[%s211 + $0x38] sm:$0xf]
      %v287 = vld [vmem:[%s211 + $0x3c] sm:$0xf]
      %v304 = vunpack.c.l.b16 %v256
      %v305 = vunpack.c.l.b16 %v257
      %v306 = vunpack.c.l.b16 %v258
      %v307 = vunpack.c.l.b16 %v259
      %v308 = vunpack.c.l.b16 %v260
      %v309 = vunpack.c.l.b16 %v261
      %v310 = vunpack.c.l.b16 %v262
      %v311 = vunpack.c.l.b16 %v263
      %v312 = vunpack.c.l.b16 %v264
      %v313 = vunpack.c.l.b16 %v265
      %v314 = vunpack.c.l.b16 %v266
      %v315 = vunpack.c.l.b16 %v267
      %v316 = vunpack.c.l.b16 %v268
      %v317 = vunpack.c.l.b16 %v269
      %v318 = vunpack.c.l.b16 %v270
      %v319 = vunpack.c.l.b16 %v271
      %v320 = vpack.c.b16 %v305, %v304
      %v321 = vpack.c.b16 %v307, %v306
      %v322 = vpack.c.b16 %v309, %v308
      %v323 = vpack.c.b16 %v311, %v310
      %v324 = vpack.c.b16 %v313, %v312
      %v325 = vpack.c.b16 %v315, %v314
      %v326 = vpack.c.b16 %v317, %v316
      %v327 = vpack.c.b16 %v319, %v318
      %v352 = vunpack.c.l.b16 %v272
      %v353 = vunpack.c.l.b16 %v273
      %v354 = vunpack.c.l.b16 %v274
      %v355 = vunpack.c.l.b16 %v275
      %v356 = vunpack.c.l.b16 %v276
      %v357 = vunpack.c.l.b16 %v277
      %v358 = vunpack.c.l.b16 %v278
      %v359 = vunpack.c.l.b16 %v279
      %v360 = vunpack.c.l.b16 %v280
      %v361 = vunpack.c.l.b16 %v281
      %v362 = vunpack.c.l.b16 %v282
      %v363 = vunpack.c.l.b16 %v283
      %v364 = vunpack.c.l.b16 %v284
      %v365 = vunpack.c.l.b16 %v285
      %v366 = vunpack.c.l.b16 %v286
      %v367 = vunpack.c.l.b16 %v287
      %v368 = vpack.c.b16 %v353, %v352
      %v369 = vpack.c.b16 %v355, %v354
      %v370 = vpack.c.b16 %v357, %v356
      %v371 = vpack.c.b16 %v359, %v358
      %v372 = vpack.c.b16 %v361, %v360
      %v373 = vpack.c.b16 %v363, %v362
      %v374 = vpack.c.b16 %v365, %v364
      %v375 = vpack.c.b16 %v367, %v366
      %384 = vmatprep.subr.bf16.mxu0 0
      %385 = vmatpush1.bf16.msra.mxu0 %v368
      %386 = vmatprep.subr.bf16.mxu0 0
      %387 = vmatpush1.bf16.msra.mxu0 %v369
      %388 = vmatprep.subr.bf16.mxu0 0
      %389 = vmatpush1.bf16.msra.mxu0 %v370
      %390 = vmatprep.subr.bf16.mxu0 0
      %391 = vmatpush1.bf16.msra.mxu0 %v371
      %392 = vmatprep.subr.bf16.mxu0 0
      %393 = vmatpush1.bf16.msra.mxu0 %v372
      %394 = vmatprep.subr.bf16.mxu0 0
      %395 = vmatpush1.bf16.msra.mxu0 %v373
      %396 = vmatprep.subr.bf16.mxu0 0
      %397 = vmatpush1.bf16.msra.mxu0 %v374
      %398 = vmatprep.subr.bf16.mxu0 0
      %399 = vmatpush1.bf16.msra.mxu0 %v375
      %400 = vmatprep.subr.bf16.mxu0 0
      %401 = vmatpush1.bf16.msra.mxu0 0
      %402 = vmatprep.subr.bf16.mxu0 0
      %403 = vmatpush1.bf16.msra.mxu0 0
      %404 = vmatprep.subr.bf16.mxu0 0
      %405 = vmatpush1.bf16.msra.mxu0 0
      %406 = vmatprep.subr.bf16.mxu0 0
      %407 = vmatpush1.bf16.msra.mxu0 0
      %408 = vmatprep.subr.bf16.mxu0 0
      %409 = vmatpush1.bf16.msra.mxu0 0
      %410 = vmatprep.subr.bf16.mxu0 0
      %411 = vmatpush1.bf16.msra.mxu0 0
      %412 = vmatprep.subr.bf16.mxu0 0
      %413 = vmatpush1.bf16.msra.mxu0 0
      %414 = vmatprep.subr.bf16.mxu0 0
      %415 = vmatpush1.bf16.msra.mxu0 0
      %416 = vmatprep.mubr.bf16.mxu0 0
      %417 = vmatmul.mubr.bf16.gmra.mrb[0].mxu0 %v320
      %v418 = vpop.f32.mrb[0].mxu0
      %v419 = vadd.f32 0.0, %v418
      %v420 = vpop.f32.mrb[0].mxu0
      %v421 = vpop.f32.mrb[0].mxu0
      %v422 = vadd.f32 0.0, %v421
      %v423 = vpop.f32.mrb[0].mxu0
      %424 = vmatprep.mubr.bf16.mxu0 0
      %425 = vmatmul.mubr.bf16.gmra.mrb[0].mxu0 %v321
      %v426 = vpop.f32.mrb[0].mxu0
      %v427 = vadd.f32 0.0, %v426
      %v428 = vpop.f32.mrb[0].mxu0
      %v429 = vpop.f32.mrb[0].mxu0
      %v430 = vadd.f32 0.0, %v429
      %v431 = vpop.f32.mrb[0].mxu0
      %432 = vmatprep.mubr.bf16.mxu0 0
      %433 = vmatmul.mubr.bf16.gmra.mrb[0].mxu0 %v322
      %v434 = vpop.f32.mrb[0].mxu0
      %v435 = vadd.f32 0.0, %v434
      %v436 = vpop.f32.mrb[0].mxu0
      %v437 = vpop.f32.mrb[0].mxu0
      %v438 = vadd.f32 0.0, %v437
      %v439 = vpop.f32.mrb[0].mxu0
      %440 = vmatprep.mubr.bf16.mxu0 0
      %441 = vmatmul.mubr.bf16.gmra.mrb[0].mxu0 %v323
      %v442 = vpop.f32.mrb[0].mxu0
      %v443 = vadd.f32 0.0, %v442
      %v444 = vpop.f32.mrb[0].mxu0
      %v445 = vpop.f32.mrb[0].mxu0
      %v446 = vadd.f32 0.0, %v445
      %v447 = vpop.f32.mrb[0].mxu0
      %448 = vmatprep.mubr.bf16.mxu0 0
      %449 = vmatmul.mubr.bf16.gmra.mrb[0].mxu0 %v324
      %v450 = vpop.f32.mrb[0].mxu0
      %v451 = vadd.f32 0.0, %v450
      %v452 = vpop.f32.mrb[0].mxu0
      %v453 = vpop.f32.mrb[0].mxu0
      %v454 = vadd.f32 0.0, %v453
      %v455 = vpop.f32.mrb[0].mxu0
      %456 = vmatprep.mubr.bf16.mxu0 0
      %457 = vmatmul.mubr.bf16.gmra.mrb[0].mxu0 %v325
      %v458 = vpop.f32.mrb[0].mxu0
      %v459 = vadd.f32 0.0, %v458
      %v460 = vpop.f32.mrb[0].mxu0
      %v461 = vpop.f32.mrb[0].mxu0
      %v462 = vadd.f32 0.0, %v461
      %v463 = vpop.f32.mrb[0].mxu0
      %464 = vmatprep.mubr.bf16.mxu0 0
      %465 = vmatmul.mubr.bf16.gmra.mrb[0].mxu0 %v326
      %v466 = vpop.f32.mrb[0].mxu0
      %v467 = vadd.f32 0.0, %v466
      %v468 = vpop.f32.mrb[0].mxu0
      %v469 = vpop.f32.mrb[0].mxu0
      %v470 = vadd.f32 0.0, %v469
      %v471 = vpop.f32.mrb[0].mxu0
      %472 = vmatprep.mubr.bf16.mxu0 0
      %473 = vmatmul.mubr.bf16.gmra.mrb[0].mxu0 %v327
      %v474 = vpop.f32.mrb[0].mxu0
      %v475 = vadd.f32 0.0, %v474
      %v476 = vpop.f32.mrb[0].mxu0
      %v477 = vpop.f32.mrb[0].mxu0
      %v478 = vadd.f32 0.0, %v477
      %v479 = vpop.f32.mrb[0].mxu0
      %480 = vdwg.mxu0
      %v481 = vadd.f32 %v240, %v419
      %v482 = vadd.f32 %v241, %v422
      %v483 = vadd.f32 %v242, %v427
      %v484 = vadd.f32 %v243, %v430
      %v485 = vadd.f32 %v244, %v435
      %v486 = vadd.f32 %v245, %v438
      %v487 = vadd.f32 %v246, %v443
      %v488 = vadd.f32 %v247, %v446
      %v489 = vadd.f32 %v248, %v451
      %v490 = vadd.f32 %v249, %v454
      %v491 = vadd.f32 %v250, %v459
      %v492 = vadd.f32 %v251, %v462
      %v493 = vadd.f32 %v252, %v467
      %v494 = vadd.f32 %v253, %v470
      %v495 = vadd.f32 %v254, %v475
      %v496 = vadd.f32 %v255, %v478
      %497 = vst [vmem:[#allocation2] sm:$0xff] %v481
      %498 = vst [vmem:[#allocation2 + $0x8] sm:$0xff] %v482
      %499 = vst [vmem:[#allocation2 + $0x10] sm:$0xff] %v483
      %500 = vst [vmem:[#allocation2 + $0x18] sm:$0xff] %v484
      %501 = vst [vmem:[#allocation2 + $0x20] sm:$0xff] %v485
      %502 = vst [vmem:[#allocation2 + $0x28] sm:$0xff] %v486
      %503 = vst [vmem:[#allocation2 + $0x30] sm:$0xff] %v487
      %504 = vst [vmem:[#allocation2 + $0x38] sm:$0xff] %v488
      %505 = vst [vmem:[#allocation2 + $0x40] sm:$0xff] %v489
      %506 = vst [vmem:[#allocation2 + $0x48] sm:$0xff] %v490
      %507 = vst [vmem:[#allocation2 + $0x50] sm:$0xff] %v491
      %508 = vst [vmem:[#allocation2 + $0x58] sm:$0xff] %v492
      %509 = vst [vmem:[#allocation2 + $0x60] sm:$0xff] %v493
      %510 = vst [vmem:[#allocation2 + $0x68] sm:$0xff] %v494
      %511 = vst [vmem:[#allocation2 + $0x70] sm:$0xff] %v495
      %512 = vst [vmem:[#allocation2 + $0x78] sm:$0xff] %v496
      // Predicated region
      $region37: #{downsample_forward.1} parent=31 // pred_check
        %p513 = pneg %p220
      $region38: #{downsample_forward.1} parent=31 // pred_check_branch
        %515 = sbr.rel (%p513) target = $region40
      $region39: #{downsample_forward.1} parent=31 // pred_region
        %v516 = vld [vmem:[#allocation2] sm:$0xff]
        %v517 = vld [vmem:[#allocation2 + $0x8] sm:$0xff]
        %v518 = vld [vmem:[#allocation2 + $0x10] sm:$0xff]
        %v519 = vld [vmem:[#allocation2 + $0x18] sm:$0xff]
        %v520 = vld [vmem:[#allocation2 + $0x20] sm:$0xff]
        %v521 = vld [vmem:[#allocation2 + $0x28] sm:$0xff]
        %v522 = vld [vmem:[#allocation2 + $0x30] sm:$0xff]
        %v523 = vld [vmem:[#allocation2 + $0x38] sm:$0xff]
        %v524 = vld [vmem:[#allocation2 + $0x40] sm:$0xff]
        %v525 = vld [vmem:[#allocation2 + $0x48] sm:$0xff]
        %v526 = vld [vmem:[#allocation2 + $0x50] sm:$0xff]
        %v527 = vld [vmem:[#allocation2 + $0x58] sm:$0xff]
        %v528 = vld [vmem:[#allocation2 + $0x60] sm:$0xff]
        %v529 = vld [vmem:[#allocation2 + $0x68] sm:$0xff]
        %v530 = vld [vmem:[#allocation2 + $0x70] sm:$0xff]
        %v531 = vld [vmem:[#allocation2 + $0x78] sm:$0xff]
        %v532 = vld [vmem:[%s2] sm:$0x1]
        %v534 = vlaneseq
        %v535 = vshrl.u32 %v534, 7
        %v536 = vsub.s32 0, %v535
        %v537 = vrot.slane %v532, %v536
        %v539 = vadd.f32 %v516, %v537
        %v540 = vadd.f32 %v517, %v537
        %v541 = vadd.f32 %v518, %v537
        %v542 = vadd.f32 %v519, %v537
        %v543 = vadd.f32 %v520, %v537
        %v544 = vadd.f32 %v521, %v537
        %v545 = vadd.f32 %v522, %v537
        %v546 = vadd.f32 %v523, %v537
        %v547 = vadd.f32 %v524, %v537
        %v548 = vadd.f32 %v525, %v537
        %v549 = vadd.f32 %v526, %v537
        %v550 = vadd.f32 %v527, %v537
        %v551 = vadd.f32 %v528, %v537
        %v552 = vadd.f32 %v529, %v537
        %v553 = vadd.f32 %v530, %v537
        %v554 = vadd.f32 %v531, %v537
        %555 = vst [vmem:[%s217] sm:$0xff] %v539
        %556 = vst [vmem:[%s217 + $0x8] sm:$0xff] %v540
        %557 = vst [vmem:[%s217 + $0x10] sm:$0xff] %v541
        %558 = vst [vmem:[%s217 + $0x18] sm:$0xff] %v542
        %559 = vst [vmem:[%s217 + $0x20] sm:$0xff] %v543
        %560 = vst [vmem:[%s217 + $0x28] sm:$0xff] %v544
        %561 = vst [vmem:[%s217 + $0x30] sm:$0xff] %v545
        %562 = vst [vmem:[%s217 + $0x38] sm:$0xff] %v546
        %563 = vst [vmem:[%s217 + $0x40] sm:$0xff] %v547
        %564 = vst [vmem:[%s217 + $0x48] sm:$0xff] %v548
        %565 = vst [vmem:[%s217 + $0x50] sm:$0xff] %v549
        %566 = vst [vmem:[%s217 + $0x58] sm:$0xff] %v550
        %567 = vst [vmem:[%s217 + $0x60] sm:$0xff] %v551
        %568 = vst [vmem:[%s217 + $0x68] sm:$0xff] %v552
        %569 = vst [vmem:[%s217 + $0x70] sm:$0xff] %v553
        %570 = vst [vmem:[%s217 + $0x78] sm:$0xff] %v554
      $region40: #{downsample_forward.1} parent=31 // pred_fallthru
        _
      %s571 = smul.u32 16, %s18
      %p572 = scmp.lt.s32.totalorder %s571, 127
      %s573 = scalar_select %p572, %s571, 127
      %s574 = smul.addr %s573, 8
      %s575 = scalar_lea.vmem %s3, %s574
      // Predicated region
      $region41: #{downsample_forward.1} parent=31 // pred_check
        %p576 = pneg %p119
      $region42: #{downsample_forward.1} parent=31 // pred_check_branch
        %578 = sbr.rel (%p576) target = $region44
      $region43: #{downsample_forward.1} parent=31 // pred_region
        %s579 = smul.u32 16, %s18
      $region44: #{downsample_forward.1} parent=31 // pred_fallthru
        _
    $region32: #{downsample_forward.1} parent=5 // pred_fallthru
      _
    %p580 = scmp.le.s32.totalorder 2, %s9
    // Predicated region
    $region45: #{downsample_forward.1} parent=5 // pred_check
      %p581 = pneg %p580
    $region46: #{downsample_forward.1} parent=5 // pred_check_branch
      %583 = sbr.rel (%p581) target = $region48
    $region47: #{downsample_forward.1} parent=5 // pred_region
      %s584 = ssub.s32 %s9, 2
      // Predicated region
      $region49: #{downsample_forward.1} parent=47 // pred_check
        %p585 = pneg %p125
      $region50: #{downsample_forward.1} parent=47 // pred_check_branch
        %587 = sbr.rel (%p585) target = $region52
      $region51: #{downsample_forward.1} parent=47 // pred_region
        %s588 = smul.u32 16, %s20
        %p589 = scmp.lt.s32.totalorder %s588, 127
        %s590 = scalar_select %p589, %s588, 127
        %s591 = smul.addr %s590, 8
        %s592 = scalar_lea.vmem %s3, %s591
      $region52: #{downsample_forward.1} parent=47 // pred_fallthru
        _
    $region48: #{downsample_forward.1} parent=5 // pred_fallthru
      _
  $region6: #{downsample_forward.1} parent=0 // loop_footer
    %s13 = sadd.s32 1, %s9
  $region7: #{downsample_forward.1} parent=0 // loop_footer_branch
    %8 = sbr.rel target = $region3
  $region8: #{downsample_forward.1} parent=0 // loop_exit
    _

</llo_original>
